<compile_context>
chip_gen: v5e
topology: v5e:2x2
jax: 0.10.0
libtpu: 0.0.40
codegen_flags: <defaults>
</compile_context>

<pallas_src>
import jax
import jax.numpy as jnp
from jax import lax
from jax.experimental import pallas as pl
from jax.experimental.pallas import tpu as pltpu

_MARGIN = 1.0   # torch triplet_margin_loss default
_EPS = 1e-6     # torch pairwise_distance default eps


def _triplet_closest_kernel(x_ref, out_ref):
    x = x_ref[...].astype(jnp.float32)                       # [N, D]
    n, d = x.shape

    # Row-wise L2 normalization: x * rsqrt(sum(x^2)) — rsqrt runs on the EUP.
    inv_norm = lax.rsqrt(jnp.sum(x * x, axis=-1, keepdims=True))
    xn = x * inv_norm                                         # [N, D]

    # Pairwise cosine similarity, contracting the last dims of both operands
    # (no explicit transpose -> no XLU vxpose before the MXU).
    sim = lax.dot_general(
        xn, xn,
        dimension_numbers=(((1,), (1,)), ((), ())),
        preferred_element_type=jnp.float32)                   # [N, N]

    # zero_diagonal=True (torchmetrics default when y is None).
    row_id = lax.broadcasted_iota(jnp.int32, (n, n), 0)
    col_id = lax.broadcasted_iota(jnp.int32, (n, n), 1)
    sim = jnp.where(row_id == col_id, jnp.float32(0.0), sim)

    # argmax(sim.flatten()) with first-occurrence tie semantics, expressed as
    # max + min-flat-index + masked-sum reductions (all vector-friendly,
    # exact since indices are small integers in f32).
    flat_f = (row_id * n + col_id).astype(jnp.float32)        # flat indices
    m = jnp.max(sim)
    idx_f = jnp.min(jnp.where(sim == m, flat_f, jnp.float32(n * n)))
    winner = flat_f == idx_f                                  # exactly one True
    row_f = jnp.sum(jnp.where(winner, row_id.astype(jnp.float32), 0.0))
    col_f = jnp.sum(jnp.where(winner, col_id.astype(jnp.float32), 0.0))

    # diff = x[row] - x[col] as a (+1/-1) masked column reduction — no dynamic
    # ref indexing.  If row == col (all off-diag sims <= 0), diff == 0, which
    # matches the PyTorch behavior (loss == margin).
    r_iota = lax.broadcasted_iota(jnp.int32, (n, 1), 0).astype(jnp.float32)
    w = (jnp.where(r_iota == row_f, jnp.float32(1.0), jnp.float32(0.0))
         - jnp.where(r_iota == col_f, jnp.float32(1.0), jnp.float32(0.0)))
    diff = jnp.sum(x * w, axis=0, keepdims=True)              # [1, D]

    # triplet_margin_loss(x[row], x[row], x[col]) with PyTorch defaults.
    eps = jnp.float32(_EPS)
    d_ap = eps * jnp.sqrt(jnp.float32(d))                     # ||a - p + eps||_2
    d_an = jnp.sqrt(jnp.sum((diff + eps) ** 2))               # ||a - n + eps||_2
    loss = jnp.maximum(d_ap - d_an + jnp.float32(_MARGIN), jnp.float32(0.0))

    out_ref[0, 0] = loss


def triplet_on_closest_emb(x):
    """Pallas equivalent of Triplet_on_closest_emb.forward for x of shape [N, D]."""
    out = pl.pallas_call(
        _triplet_closest_kernel,
        out_shape=jax.ShapeDtypeStruct((1, 1), jnp.float32),
        in_specs=[pl.BlockSpec(memory_space=pltpu.MemorySpace.VMEM)],
        out_specs=pl.BlockSpec(memory_space=pltpu.MemorySpace.SMEM),
    )(x)
    return out[0, 0]


def _reference(x, margin=_MARGIN, eps=_EPS):
    """Pure-JAX reference mirroring the PyTorch module."""
    n = x.shape[0]
    xn = x / jnp.linalg.norm(x, axis=1, keepdims=True)
    sim = xn @ xn.T
    sim = sim * (1.0 - jnp.eye(n, dtype=sim.dtype))           # zero diagonal
    ind = jnp.argmax(sim.reshape(-1))                         # first occurrence
    row, col = ind // n, ind % n
    d_ap = jnp.sqrt(jnp.sum((x[row] - x[row] + eps) ** 2))
    d_an = jnp.sqrt(jnp.sum((x[row] - x[col] + eps) ** 2))
    return jnp.maximum(d_ap - d_an + margin, 0.0)


if __name__ == "__main__":
    # Small deterministic inputs: N node embeddings of dimension D.
    # Scaled down so the closest pair is within the margin and the loss is
    # non-zero (exercises the gather + distance path, not just the relu clamp).
    N, D = 8, 128
    key = jax.random.PRNGKey(0)
    x = 0.05 * jax.random.normal(key, (N, D), dtype=jnp.float32)

    loss = triplet_on_closest_emb(x)
    loss = jax.block_until_ready(loss)

    ref = _reference(x)
    assert jnp.allclose(loss, ref, atol=1e-4, rtol=1e-4), (loss, ref)

    print("KERNEL_OK")
</pallas_src>

<mosaic_0001>
module attributes {stable_mosaic.version = 11 : i64} {
  func.func @_triplet_closest_kernel(%arg0: memref<8x128xf32, #tpu.memory_space<vmem>>, %arg1: memref<1x1xf32, #tpu.memory_space<smem>>) attributes {dimension_semantics = [], scalar_prefetch = 0 : i64, scratch_operands = 0 : i64, tpu.core_type = #tpu.core_type<tc>} {
    %c0 = arith.constant 0 : index
    %c0_0 = arith.constant 0 : index
    %0 = vector.load %arg0[%c0, %c0_0] : memref<8x128xf32, #tpu.memory_space<vmem>>, vector<8x128xf32>
    %1 = arith.mulf %0, %0 : vector<8x128xf32>
    %cst = arith.constant dense<0.000000e+00> : vector<8xf32>
    %2 = vector.multi_reduction <add>, %1, %cst [1] : vector<8x128xf32> to vector<8xf32>
    %3 = vector.shape_cast %2 : vector<8xf32> to vector<8x1xf32>
    %4 = math.rsqrt %3 : vector<8x1xf32>
    %5 = vector.broadcast %4 : vector<8x1xf32> to vector<8x128xf32>
    %6 = arith.mulf %0, %5 : vector<8x128xf32>
    %cst_1 = arith.constant dense<0.000000e+00> : vector<8x8xf32>
    %7 = tpu.matmul %6, %6, %cst_1 {dimension_numbers = #tpu.dot_dimension_numbers<[1], [1], [0], [0], [0, 0, 1, 0], [], []>} : vector<8x128xf32>, vector<8x128xf32>, vector<8x8xf32> -> vector<8x8xf32>
    %8 = tpu.iota {dimensions = array<i32: 0>} : vector<8x8xi32>
    %9 = tpu.iota {dimensions = array<i32: 1>} : vector<8x8xi32>
    %10 = arith.cmpi eq, %8, %9 : vector<8x8xi32>
    %cst_2 = arith.constant 0.000000e+00 : f32
    %11 = vector.broadcast %cst_2 : f32 to vector<8x8xf32>
    %12 = arith.select %10, %11, %7 : vector<8x8xi1>, vector<8x8xf32>
    %c8_i32 = arith.constant 8 : i32
    %13 = vector.broadcast %c8_i32 : i32 to vector<8x8xi32>
    %14 = arith.muli %8, %13 : vector<8x8xi32>
    %15 = arith.addi %14, %9 : vector<8x8xi32>
    %16 = arith.sitofp %15 : vector<8x8xi32> to vector<8x8xf32>
    %17 = vector.shape_cast %12 : vector<8x8xf32> to vector<1x8x8xf32>
    %cst_3 = arith.constant dense<0xFF800000> : vector<1xf32>
    %18 = vector.multi_reduction <maximumf>, %17, %cst_3 [1, 2] : vector<1x8x8xf32> to vector<1xf32>
    %19 = vector.shape_cast %18 : vector<1xf32> to vector<1x1x1xf32>
    %20 = vector.extract %19[0, 0, 0] : f32 from vector<1x1x1xf32>
    %21 = vector.broadcast %20 : f32 to vector<8x8xf32>
    %22 = arith.cmpf oeq, %12, %21 : vector<8x8xf32>
    %cst_4 = arith.constant 6.400000e+01 : f32
    %23 = vector.broadcast %cst_4 : f32 to vector<8x8xf32>
    %24 = arith.select %22, %16, %23 : vector<8x8xi1>, vector<8x8xf32>
    %25 = vector.shape_cast %24 : vector<8x8xf32> to vector<1x8x8xf32>
    %cst_5 = arith.constant dense<0x7F800000> : vector<1xf32>
    %26 = vector.multi_reduction <minimumf>, %25, %cst_5 [1, 2] : vector<1x8x8xf32> to vector<1xf32>
    %27 = vector.shape_cast %26 : vector<1xf32> to vector<1x1x1xf32>
    %28 = vector.extract %27[0, 0, 0] : f32 from vector<1x1x1xf32>
    %29 = vector.broadcast %28 : f32 to vector<8x8xf32>
    %30 = arith.cmpf oeq, %16, %29 : vector<8x8xf32>
    %31 = arith.sitofp %8 : vector<8x8xi32> to vector<8x8xf32>
    %cst_6 = arith.constant 0.000000e+00 : f32
    %32 = vector.broadcast %cst_6 : f32 to vector<8x8xf32>
    %33 = arith.select %30, %31, %32 : vector<8x8xi1>, vector<8x8xf32>
    %34 = vector.shape_cast %33 : vector<8x8xf32> to vector<1x8x8xf32>
    %cst_7 = arith.constant dense<0.000000e+00> : vector<1xf32>
    %35 = vector.multi_reduction <add>, %34, %cst_7 [1, 2] : vector<1x8x8xf32> to vector<1xf32>
    %36 = vector.shape_cast %35 : vector<1xf32> to vector<1x1x1xf32>
    %37 = vector.extract %36[0, 0, 0] : f32 from vector<1x1x1xf32>
    %38 = arith.sitofp %9 : vector<8x8xi32> to vector<8x8xf32>
    %cst_8 = arith.constant 0.000000e+00 : f32
    %39 = vector.broadcast %cst_8 : f32 to vector<8x8xf32>
    %40 = arith.select %30, %38, %39 : vector<8x8xi1>, vector<8x8xf32>
    %41 = vector.shape_cast %40 : vector<8x8xf32> to vector<1x8x8xf32>
    %cst_9 = arith.constant dense<0.000000e+00> : vector<1xf32>
    %42 = vector.multi_reduction <add>, %41, %cst_9 [1, 2] : vector<1x8x8xf32> to vector<1xf32>
    %43 = vector.shape_cast %42 : vector<1xf32> to vector<1x1x1xf32>
    %44 = vector.extract %43[0, 0, 0] : f32 from vector<1x1x1xf32>
    %45 = tpu.iota {dimensions = array<i32: 0>} : vector<8x1xi32>
    %46 = arith.sitofp %45 : vector<8x1xi32> to vector<8x1xf32>
    %47 = vector.broadcast %37 : f32 to vector<8x1xf32>
    %48 = arith.cmpf oeq, %46, %47 : vector<8x1xf32>
    %cst_10 = arith.constant 1.000000e+00 : f32
    %cst_11 = arith.constant 0.000000e+00 : f32
    %49 = vector.broadcast %cst_10 : f32 to vector<8x1xf32>
    %50 = vector.broadcast %cst_11 : f32 to vector<8x1xf32>
    %51 = arith.select %48, %49, %50 : vector<8x1xi1>, vector<8x1xf32>
    %52 = vector.broadcast %44 : f32 to vector<8x1xf32>
    %53 = arith.cmpf oeq, %46, %52 : vector<8x1xf32>
    %cst_12 = arith.constant 1.000000e+00 : f32
    %cst_13 = arith.constant 0.000000e+00 : f32
    %54 = vector.broadcast %cst_12 : f32 to vector<8x1xf32>
    %55 = vector.broadcast %cst_13 : f32 to vector<8x1xf32>
    %56 = arith.select %53, %54, %55 : vector<8x1xi1>, vector<8x1xf32>
    %57 = arith.subf %51, %56 : vector<8x1xf32>
    %58 = vector.broadcast %57 : vector<8x1xf32> to vector<8x128xf32>
    %59 = arith.mulf %0, %58 : vector<8x128xf32>
    %cst_14 = arith.constant dense<0.000000e+00> : vector<128xf32>
    %60 = vector.multi_reduction <add>, %59, %cst_14 [0] : vector<8x128xf32> to vector<128xf32>
    %61 = vector.shape_cast %60 : vector<128xf32> to vector<1x128xf32>
    %cst_15 = arith.constant 1.280000e+02 : f32
    %62 = math.sqrt %cst_15 : f32
    %cst_16 = arith.constant 9.99999997E-7 : f32
    %63 = arith.mulf %cst_16, %62 : f32
    %cst_17 = arith.constant 9.99999997E-7 : f32
    %64 = vector.broadcast %cst_17 : f32 to vector<1x128xf32>
    %65 = arith.addf %61, %64 : vector<1x128xf32>
    %66 = arith.mulf %65, %65 : vector<1x128xf32>
    %67 = vector.shape_cast %66 : vector<1x128xf32> to vector<1x1x128xf32>
    %cst_18 = arith.constant dense<0.000000e+00> : vector<1xf32>
    %68 = vector.multi_reduction <add>, %67, %cst_18 [1, 2] : vector<1x1x128xf32> to vector<1xf32>
    %69 = vector.shape_cast %68 : vector<1xf32> to vector<1x1x1xf32>
    %70 = vector.extract %69[0, 0, 0] : f32 from vector<1x1x1xf32>
    %71 = math.sqrt %70 : f32
    %72 = arith.subf %63, %71 : f32
    %cst_19 = arith.constant 1.000000e+00 : f32
    %73 = arith.addf %72, %cst_19 : f32
    %cst_20 = arith.constant 0.000000e+00 : f32
    %74 = arith.maximumf %73, %cst_20 : f32
    %c0_21 = arith.constant 0 : index
    %c0_22 = arith.constant 0 : index
    %75 = memref.load %arg1[%c0_21, %c0_22] : memref<1x1xf32, #tpu.memory_space<smem>>
    memref.store %74, %arg1[%c0_21, %c0_22] : memref<1x1xf32, #tpu.memory_space<smem>>
    return
  }
}

</mosaic_0001>

<llo_original>
// kernel: tpu_custom_call.1
$region0: #{tpu_custom_call.1}
  #allocation0 [shape = 'u32[]', space=smem, size = 0x4, offset = 0x4, fixed_abs, tag = 'smem constant byte address 0x4 - core index']
  #allocation1 [shape = 'u32[72,128]{1,0:T(1,128)}', space=vmem, size = 0x9000, scoped, tag = 'internal scratch']
  %s0 = inlined_call_operand.hbm [shape: f32[8,128], index: 0, kind: input, shape index: {}]
  %s1 = inlined_call_operand.hbm [shape: f32[1,1], index: 1, kind: output, shape index: {}]
  %s2 = sld [smem:[#allocation0]]
  $region18: #{tpu_custom_call.1} parent=0
    _
  %s4 = ssub.s32 1, %s2
  %s5 = scalar_select 0, %s4, %s2
  $region1: #{tpu_custom_call.1} parent=0
    #allocation2 [shape = 'u8[4096]{0}', space=vmem, size = 0x1000, scoped, tag = 'input window, operand 0, single buffered']
    #allocation3 [shape = 's32[1]{0}', space=sflag, size = 0x4, scoped, tag = 'scoped memory for tpu_custom_call.1']
    #allocation4 [shape = 's32[1]{0}', space=sflag, size = 0x4, scoped, tag = 'scoped memory for tpu_custom_call.1']
    #allocation5 [shape = 'u8[512]{0}', space=smem, size = 0x200, scoped, tag = 'output window, operand 0, single buffered']
    %6 = vsyncpa [#allocation3], 0
    %7 = vsyncpa [#allocation4], 0
    // Predicated region
    $region2: #{tpu_custom_call.1} parent=1 // pred_check
      _
    $region3: #{tpu_custom_call.1} parent=1 // pred_check_branch
      %9 = sbr.rel (0) target = $region5
    $region4: #{tpu_custom_call.1} parent=1 // pred_region
      %11 = vsyncadd [#allocation3], 0
      %s13 = sshll.u32 %s0, 4
      %s14 = int_to_ptr.hbm [resolvable:$true] %s13
      %s15 = sshll.u32 [#allocation2], 4
      %s16 = int_to_ptr.vmem [resolvable:$true] %s15
      %18 = dma.hbm_to_vmem [thread:$0]  %s14, 128, %s16, [#allocation3]
    $region5: #{tpu_custom_call.1} parent=1 // pred_fallthru
      _
    // Predicated region
    $region6: #{tpu_custom_call.1} parent=1 // pred_check
      _
    $region7: #{tpu_custom_call.1} parent=1 // pred_check_branch
      %20 = sbr.rel (0) target = $region9
    $region8: #{tpu_custom_call.1} parent=1 // pred_region
      %22 = dma.done [#allocation3], 128
    $region9: #{tpu_custom_call.1} parent=1 // pred_fallthru
      _
    %v23 = vld [vmem:[#allocation2] sm:$0xff]
    %v24 = vmul.f32 %v23, %v23
    %25 = vadd.xlane.f32.xlu0 %v24
    %v26 = vpop.xlane.xlu0 %25
    %v27 = vrsqrt.pop %v26
    %v28 = vmul.f32 %v27, %v26
    %v29 = vmul.f32 %v28, %v27
    %v30 = vmul.f32 0.5, %v29
    %v31 = vsub.f32 1.5, %v30
    %v32 = vmul.f32 %v27, %v31
    %vm33 = vweird.f32 %v26
    %vm34 = vweird.f32 %v27
    %vm35 = vmor %vm33, %vm34
    %v36 = vsel %vm35, %v27, %v32
    %v37 = vmul.f32 %v23, %v36
    %38 = vmatpush.xpose.msra.mxu0 0.0
    %39 = vmatpush.xpose.msra.mxu0 0.0
    %40 = vmatpush.xpose.msra.mxu0 0.0
    %41 = vmatpush.xpose.msra.mxu0 0.0
    %42 = vmatpush.xpose.msra.mxu0 0.0
    %43 = vmatpush.xpose.msra.mxu0 0.0
    %44 = vmatpush.xpose.msra.mxu0 0.0
    %45 = vmatpush.xpose.msra.mxu0 0.0
    %46 = vmatpush.xpose.msra.mxu0 0.0
    %47 = vmatpush.xpose.msra.mxu0 0.0
    %48 = vmatpush.xpose.msra.mxu0 0.0
    %49 = vmatpush.xpose.msra.mxu0 0.0
    %50 = vmatpush.xpose.msra.mxu0 0.0
    %51 = vmatpush.xpose.msra.mxu0 0.0
    %52 = vmatpush.xpose.msra.mxu0 0.0
    %53 = vmatpush.xpose.msra.mxu0 %v37
    %54 = vmatmul.f32.gmra.mxu0 %v37
    %v55 = vpop.f32.mrf.mxu0
    %v56 = vadd.f32 0.0, %v55
    %57 = vdwg.mxu0
    %v58 = vlaneseq
    %v59 = vshrl.u32 %v58, 7
    %v60 = vlaneseq
    %v61 = vand.u32 %v60, 127
    %vm62 = vcmp.eq.s32.totalorder %v59, %v61
    %v63 = vsel %vm62, 0.0, %v56
    %v64 = vmul.u32 %v59, 8
    %v65 = vadd.s32 %v64, %v61
    %v66 = vcvt.s32.f32 %v65
    %vm67 = vcmask 64512
    %v68 = vsel %vm67, %v63, -inf
    %69 = vmax.xlane.f32.xlu0 %v68
    %v70 = vpop.xlane.xlu0 %69
    %v71 = vrot.slane %v70, 4
    %v72 = vmax.f32 %v70, %v71
    %v73 = vrot.slane %v72, 2
    %v74 = vmax.f32 %v72, %v73
    %v75 = vrot.slane %v74, 1
    %v76 = vmax.f32 %v74, %v75
    %s77 = vtos %v76
    %v78 = vstv %s77
    %vm79 = vcmp.eq.f32.partialorder %v63, %v78
    %v80 = vsel %vm79, %v66, 64.0
    %v81 = vsel %vm67, %v80, inf
    %82 = vmin.xlane.f32.xlu0 %v81
    %v83 = vpop.xlane.xlu0 %82
    %v84 = vrot.slane %v83, 4
    %v85 = vmin.f32 %v83, %v84
    %v86 = vrot.slane %v85, 2
    %v87 = vmin.f32 %v85, %v86
    %v88 = vrot.slane %v87, 1
    %v89 = vmin.f32 %v87, %v88
    %s90 = vtos %v89
    %v91 = vstv %s90
    %vm92 = vcmp.eq.f32.partialorder %v66, %v91
    %v93 = vcvt.s32.f32 %v59
    %v94 = vsel %vm92, %v93, 0.0
    %v95 = vsel %vm67, %v94, 0.0
    %96 = vadd.xlane.f32.xlu0 %v95
    %v97 = vpop.xlane.xlu0 %96
    %v98 = vrot.slane %v97, 4
    %v99 = vadd.f32 %v97, %v98
    %v100 = vrot.slane %v99, 2
    %v101 = vadd.f32 %v99, %v100
    %v102 = vrot.slane %v101, 1
    %v103 = vadd.f32 %v101, %v102
    %s104 = vtos %v103
    %v105 = vcvt.s32.f32 %v61
    %v106 = vsel %vm92, %v105, 0.0
    %v107 = vsel %vm67, %v106, 0.0
    %108 = vadd.xlane.f32.xlu0 %v107
    %v109 = vpop.xlane.xlu0 %108
    %v110 = vrot.slane %v109, 4
    %v111 = vadd.f32 %v109, %v110
    %v112 = vrot.slane %v111, 2
    %v113 = vadd.f32 %v111, %v112
    %v114 = vrot.slane %v113, 1
    %v115 = vadd.f32 %v113, %v114
    %s116 = vtos %v115
    %v117 = vstv %s104
    %vm118 = vcmp.eq.f32.partialorder %v93, %v117
    %v119 = vsel %vm118, 1.0, 0.0
    %v120 = vstv %s116
    %vm121 = vcmp.eq.f32.partialorder %v93, %v120
    %v122 = vsel %vm121, 1.0, 0.0
    %v123 = vsub.f32 %v119, %v122
    %v124 = vmul.f32 %v23, %v123
    %v125 = vrot.slane %v124, 4
    %v126 = vadd.f32 %v124, %v125
    %v127 = vrot.slane %v126, 2
    %v128 = vadd.f32 %v126, %v127
    %v129 = vrot.slane %v128, 1
    %v130 = vadd.f32 %v128, %v129
    %v131 = vadd.f32 %v130, 1e-06
    %v132 = vmul.f32 %v131, %v131
    %vm133 = vcmask 1040384
    %v134 = vsel %vm133, %v132, 0.0
    %135 = vadd.xlane.f32.xlu0 %v134
    %v136 = vpop.xlane.xlu0 %135
    %v137 = vrot.slane %v136, 4
    %v138 = vadd.f32 %v136, %v137
    %v139 = vrot.slane %v138, 2
    %v140 = vadd.f32 %v138, %v139
    %v141 = vrot.slane %v140, 1
    %v142 = vadd.f32 %v140, %v141
    %s143 = vtos %v142
    %v144 = vstv %s143
    %v145 = vrsqrt.pop %v144
    %v146 = vmul.f32 %v145, %v144
    %v147 = vmul.f32 %v146, %v145
    %v148 = vmul.f32 0.5, %v147
    %v149 = vsub.f32 1.5, %v148
    %v150 = vmul.f32 %v145, %v149
    %v151 = vmul.f32 %v144, %v150
    %vm152 = vcmp.eq.f32.partialorder %v144, inf
    %v153 = vsel %vm152, %v144, %v151
    %vm154 = vcmp.eq.f32.partialorder %v144, 0.0
    %v155 = vand.u32 %v144, 2147483648
    %v156 = vsel %vm154, %v155, %v153
    %s157 = vtos %v156
    %s158 = ssub.f32 1.13137085e-05, %s157
    %s159 = sadd.f32 %s158, 1.0
    %s160 = smax.f32 %s159, 0.0
    %s161 = scalar_lea.smem [#allocation5], 0
    %162 = sst [smem:[%s161]] %s160
    // Predicated region
    $region10: #{tpu_custom_call.1} parent=1 // pred_check
      _
    $region11: #{tpu_custom_call.1} parent=1 // pred_check_branch
      %164 = sbr.rel (0) target = $region13
    $region12: #{tpu_custom_call.1} parent=1 // pred_region
      %166 = vsyncadd [#allocation4], 0
      %s168 = sshll.u32 %s1, 4
      %s169 = int_to_ptr.hbm [resolvable:$true] %s168
      %171 = dma.smem_to_hbm [#allocation5], 16, %s169, [#allocation4]
    $region13: #{tpu_custom_call.1} parent=1 // pred_fallthru
      _
    // Predicated region
    $region14: #{tpu_custom_call.1} parent=1 // pred_check
      _
    $region15: #{tpu_custom_call.1} parent=1 // pred_check_branch
      %173 = sbr.rel (0) target = $region17
    $region16: #{tpu_custom_call.1} parent=1 // pred_region
      %175 = dma.done [#allocation4], 16
    $region17: #{tpu_custom_call.1} parent=1 // pred_fallthru
      _
    %176 = sfence
    %177 = vsyncpa [#allocation3], 1
    %178 = vsyncpa [#allocation4], 1

</llo_original>
